<compile_context>
chip_gen: v7x
topology: tpu7x:2x2x1
jax: 0.10.0
libtpu: 0.0.40
codegen_flags: <defaults>
</compile_context>

<pallas_src>
import functools
import math

import jax
import jax.numpy as jnp
from jax.experimental import pallas as pl
from jax.experimental.pallas import tpu as pltpu


def _fpn_kernel(x_ref, skip_ref, w_ref, b_ref, e_ref, out_ref, *, k, w_width, conv_dtype):
    # x_ref:    (Cp, k*W)    un-upsampled x, k whole coarse rows, channel-major
    # skip_ref: (Cs, 4*k*W)  skip pixels of the matching 2k output rows, channel-major
    # w_ref:    (Cp, Cs)     1x1 conv weight (grid-resident, already conv_dtype)
    # b_ref:    (Cp, 1)      f32 bias (resident)
    # e_ref:    (W, 4*W)     f32 0/1 nearest-upsample expansion matrix (resident)
    # out_ref:  (Cp, 4*k*W)
    W = w_width
    L = 4 * W
    # 1x1 conv over channels: one channel-major MXU matmul for the whole tile,
    # f32 accumulation.  The bf16 cast happens in VMEM (no HBM cost).
    conv = jnp.dot(w_ref[...], skip_ref[...].astype(conv_dtype),
                   preferred_element_type=jnp.float32)
    conv = conv + b_ref[...]                      # (Cp, 1) lane-broadcast bias
    e = e_ref[...]
    for hh in range(k):                           # static unroll over coarse rows
        # Exact f32 residual: x_row (Cp, W) @ E (W, 4W) places x[o, w] into the
        # four (row-parity, col-parity) positions of the 2x nearest upsample.
        xu = jnp.dot(x_ref[:, hh * W:(hh + 1) * W].astype(jnp.float32), e,
                     preferred_element_type=jnp.float32)
        out_ref[:, hh * L:(hh + 1) * L] = (
            conv[:, hh * L:(hh + 1) * L] + xu).astype(out_ref.dtype)


def _lcm(a, b):
    return a * b // math.gcd(a, b)


def _round_down(v, m):
    return (v // m) * m


def _pick_spatial_tile(HW, W, N, per_kw_bytes, *, budget_bytes=24 << 20, max_k=32):
    """Coarse-spatial elements (k*W: whole coarse rows) handled per grid step."""
    m = _lcm(W, 128)          # tile must be 128-lane aligned and whole coarse rows
    if m > HW:
        return HW             # too small to tile legally: one image per step
    kw = min(budget_bytes // max(per_kw_bytes, 1), max_k * W, HW)
    kw = max(m, _round_down(kw, m))
    # Best effort: keep >=4 total grid steps so both v7x TensorCores get work.
    tiles_per_image = -(-4 // N)
    if tiles_per_image > 1:
        cap = _round_down(HW // tiles_per_image, m)
        if cap >= m:
            kw = min(kw, cap)
    return kw


def fpn_block_pallas(x_nchw, skip_nchw, weight, bias, *,
                     out_dtype=None, conv_dtype=jnp.bfloat16, spatial_tile=None):
    """FPNBlock forward: interpolate(x, 2, 'nearest') + Conv2d_1x1(skip).

    x_nchw:    (N, Cp, H, W)     coarse pyramid level
    skip_nchw: (N, Cs, 2H, 2W)   skip connection (2x resolution)
    weight:    (Cp, Cs, 1, 1)    PyTorch Conv2d 1x1 weight
    bias:      (Cp,)
    Returns    (N, Cp, 2H, 2W)

    conv_dtype: MXU dtype of the 1x1-conv operands (cast in-kernel only; the
      residual x path is always exact f32).  Use jnp.float32 for f32 parity.
    out_dtype:  output dtype (defaults to x.dtype); jnp.bfloat16 cuts output
      HBM traffic when the consumer accepts it.
    """
    N, Cp, H, W = x_nchw.shape
    Ns, Cs, H2, W2 = skip_nchw.shape
    assert Ns == N and H2 == 2 * H and W2 == 2 * W
    assert weight.shape == (Cp, Cs, 1, 1) and bias.shape == (Cp,)
    if out_dtype is None:
        out_dtype = x_nchw.dtype
    HW = H * W

    # ---- free views only: no relayout passes in HBM -------------------------
    x3 = x_nchw.reshape(N, Cp, HW)
    skip3 = skip_nchw.reshape(N, Cs, 4 * HW)
    w2 = weight.reshape(Cp, Cs).astype(conv_dtype)          # tiny, resident
    b2 = bias.reshape(Cp, 1).astype(jnp.float32)
    # 0/1 nearest-upsample expansion: lane l of a 4W output chunk
    # ([row 2h | row 2h+1], each 2W wide) takes x column (l % 2W) // 2.
    src = (jnp.arange(4 * W) % (2 * W)) // 2
    emat = (src[None, :] == jnp.arange(W)[:, None]).astype(jnp.float32)

    # ---- spatial tile size (whole coarse rows, 128-lane aligned) ------------
    sb = jnp.dtype(skip_nchw.dtype).itemsize
    xb = jnp.dtype(x_nchw.dtype).itemsize
    ob = jnp.dtype(out_dtype).itemsize
    cb = jnp.dtype(conv_dtype).itemsize
    # double-buffered streams + f32 conv accumulator + conv_dtype skip cast temp
    per_kw = 2 * (4 * Cs * sb + Cp * xb + 4 * Cp * ob) + 16 * Cp + 4 * Cs * cb
    if spatial_tile is None:
        kw = _pick_spatial_tile(HW, W, N, per_kw)
    else:
        kw = min(int(spatial_tile), HW)
        if kw < HW:
            m = _lcm(W, 128)
            kw = HW if m > HW else max(m, _round_down(kw, m))
    k = kw // W

    out3 = pl.pallas_call(
        functools.partial(_fpn_kernel, k=k, w_width=W, conv_dtype=conv_dtype),
        out_shape=jax.ShapeDtypeStruct((N, Cp, 4 * HW), out_dtype),
        grid_spec=pltpu.PrefetchScalarGridSpec(
            num_scalar_prefetch=0,
            grid=(N, pl.cdiv(HW, kw)),
            in_specs=[
                pl.BlockSpec((None, Cp, kw), lambda n, i: (n, 0, i)),       # x rows
                pl.BlockSpec((None, Cs, 4 * kw), lambda n, i: (n, 0, i)),   # skip pixels
                pl.BlockSpec((Cp, Cs), lambda n, i: (0, 0)),                # weight (resident)
                pl.BlockSpec((Cp, 1), lambda n, i: (0, 0)),                 # bias (resident)
                pl.BlockSpec((W, 4 * W), lambda n, i: (0, 0)),              # E (resident)
            ],
            out_specs=pl.BlockSpec((None, Cp, 4 * kw), lambda n, i: (n, 0, i)),
        ),
        compiler_params=pltpu.CompilerParams(
            dimension_semantics=("parallel", "parallel"),
            vmem_limit_bytes=48 * 1024 * 1024,
        ),
    )(x3, skip3, w2, b2, emat)

    return out3.reshape(N, Cp, H2, W2)


def fpn_block_reference(x, skip, weight, bias, *, conv_dtype=jnp.float32):
    """Plain-JAX reference mirroring the PyTorch forward (conv operands in conv_dtype)."""
    q = lambda a: a.astype(conv_dtype).astype(jnp.float32)
    x_up = jnp.repeat(jnp.repeat(x.astype(jnp.float32), 2, axis=2), 2, axis=3)
    w2d = q(weight).reshape(weight.shape[0], weight.shape[1])
    conv = jnp.einsum('oc,nchw->nohw', w2d, q(skip))
    return x_up + conv + bias.astype(jnp.float32).reshape(1, -1, 1, 1)


if __name__ == "__main__":
    key = jax.random.PRNGKey(0)
    ks = jax.random.split(key, 8)
    # Values quantized to bf16-representable f32 so kernel/reference agree to
    # accumulation-order rounding regardless of MXU pass mode.
    q16 = lambda a: a.astype(jnp.bfloat16).astype(jnp.float32)

    # --- test 1: small FPN-like shapes (one spatial tile per image, bf16 conv) ---
    N, Cp, Cs, H, W = 2, 4, 4, 8, 8
    x = q16(jax.random.normal(ks[0], (N, Cp, H, W), dtype=jnp.float32))
    skip = q16(jax.random.normal(ks[1], (N, Cs, 2 * H, 2 * W), dtype=jnp.float32))
    bound = 1.0 / (Cs ** 0.5)
    weight = q16(jax.random.uniform(ks[2], (Cp, Cs, 1, 1), minval=-bound,
                                    maxval=bound, dtype=jnp.float32))
    bias = jax.random.uniform(ks[3], (Cp,), minval=-bound, maxval=bound,
                              dtype=jnp.float32)

    run = jax.jit(functools.partial(fpn_block_pallas, conv_dtype=jnp.bfloat16))
    out = jax.block_until_ready(run(x, skip, weight, bias))
    ref = fpn_block_reference(x, skip, weight, bias, conv_dtype=jnp.bfloat16)
    assert out.shape == (N, Cp, 2 * H, 2 * W)
    assert out.dtype == x.dtype
    assert jnp.allclose(out, ref, atol=1e-3, rtol=1e-3)

    # --- test 2: multi-tile spatial grid with a non-dividing tail, f32 conv ------
    Nb, Cpb, Csb, Hb, Wb = 1, 8, 16, 10, 32        # HW = 320, tile = 128 -> 3 steps
    x2 = q16(jax.random.normal(ks[4], (Nb, Cpb, Hb, Wb), dtype=jnp.float32))
    skip2 = q16(jax.random.normal(ks[5], (Nb, Csb, 2 * Hb, 2 * Wb), dtype=jnp.float32))
    bound2 = 1.0 / (Csb ** 0.5)
    weight2 = q16(jax.random.uniform(ks[6], (Cpb, Csb, 1, 1), minval=-bound2,
                                     maxval=bound2, dtype=jnp.float32))
    bias2 = jax.random.uniform(ks[7], (Cpb,), minval=-bound2, maxval=bound2,
                               dtype=jnp.float32)

    run2 = jax.jit(functools.partial(fpn_block_pallas, conv_dtype=jnp.float32,
                                     spatial_tile=128))
    out2 = jax.block_until_ready(run2(x2, skip2, weight2, bias2))
    ref2 = fpn_block_reference(x2, skip2, weight2, bias2, conv_dtype=jnp.float32)
    assert out2.shape == (Nb, Cpb, 2 * Hb, 2 * Wb)
    assert jnp.allclose(out2, ref2, atol=1e-3, rtol=1e-3)

    print("KERNEL_OK")
</pallas_src>

<mosaic_0001>
module attributes {stable_mosaic.version = 11 : i64} {
  func.func @_fpn_kernel(%arg0: i32, %arg1: i32, %arg2: memref<1x4x64xf32, #tpu.memory_space<vmem>>, %arg3: memref<1x4x256xf32, #tpu.memory_space<vmem>>, %arg4: memref<4x4xbf16, #tpu.memory_space<vmem>>, %arg5: memref<4x1xf32, #tpu.memory_space<vmem>>, %arg6: memref<8x32xf32, #tpu.memory_space<vmem>>, %arg7: memref<1x4x256xf32, #tpu.memory_space<vmem>>) attributes {dimension_semantics = [#tpu.dimension_semantics<parallel>, #tpu.dimension_semantics<parallel>], iteration_bounds = array<i64: 2, 1>, scalar_prefetch = 0 : i64, scratch_operands = 0 : i64, tpu.core_type = #tpu.core_type<tc>, window_params = [{transform_indices = @transform_0, window_bounds = array<i64: 1, 4, 64>}, {transform_indices = @transform_1, window_bounds = array<i64: 1, 4, 256>}, {pipeline_mode = #tpu.pipeline_mode<synchronous>, transform_indices = @transform_2, window_bounds = array<i64: 4, 4>}, {pipeline_mode = #tpu.pipeline_mode<synchronous>, transform_indices = @transform_3, window_bounds = array<i64: 4, 1>}, {pipeline_mode = #tpu.pipeline_mode<synchronous>, transform_indices = @transform_4, window_bounds = array<i64: 8, 32>}, {transform_indices = @transform_5, window_bounds = array<i64: 1, 4, 256>}]} {
    %c0 = arith.constant 0 : index
    %c0_0 = arith.constant 0 : index
    %0 = vector.load %arg4[%c0, %c0_0] : memref<4x4xbf16, #tpu.memory_space<vmem>>, vector<4x4xbf16>
    %c0_1 = arith.constant 0 : index
    %c0_2 = arith.constant 0 : index
    %c0_3 = arith.constant 0 : index
    %1 = vector.load %arg3[%c0_1, %c0_2, %c0_3] : memref<1x4x256xf32, #tpu.memory_space<vmem>>, vector<1x4x256xf32>
    %2 = vector.shape_cast %1 : vector<1x4x256xf32> to vector<4x256xf32>
    %3 = arith.truncf %2 : vector<4x256xf32> to vector<4x256xbf16>
    %cst = arith.constant dense<0.000000e+00> : vector<4x256xf32>
    %4 = tpu.matmul %0, %3, %cst {dimension_numbers = #tpu.dot_dimension_numbers<[1], [0], [0], [1], [0, 0, 1, 1], [], []>} : vector<4x4xbf16>, vector<4x256xbf16>, vector<4x256xf32> -> vector<4x256xf32>
    %c0_4 = arith.constant 0 : index
    %c0_5 = arith.constant 0 : index
    %5 = vector.load %arg5[%c0_4, %c0_5] : memref<4x1xf32, #tpu.memory_space<vmem>>, vector<4x1xf32>
    %6 = vector.broadcast %5 : vector<4x1xf32> to vector<4x256xf32>
    %7 = arith.addf %4, %6 : vector<4x256xf32>
    %c0_6 = arith.constant 0 : index
    %c0_7 = arith.constant 0 : index
    %8 = vector.load %arg6[%c0_6, %c0_7] : memref<8x32xf32, #tpu.memory_space<vmem>>, vector<8x32xf32>
    %c0_8 = arith.constant 0 : index
    %c0_9 = arith.constant 0 : index
    %c0_10 = arith.constant 0 : index
    %9 = vector.load %arg2[%c0_8, %c0_9, %c0_10] : memref<1x4x64xf32, #tpu.memory_space<vmem>>, vector<1x4x8xf32>
    %10 = vector.shape_cast %9 : vector<1x4x8xf32> to vector<4x8xf32>
    %cst_11 = arith.constant dense<0.000000e+00> : vector<4x32xf32>
    %11 = tpu.matmul %10, %8, %cst_11 {dimension_numbers = #tpu.dot_dimension_numbers<[1], [0], [0], [1], [0, 0, 1, 1], [], []>} : vector<4x8xf32>, vector<8x32xf32>, vector<4x32xf32> -> vector<4x32xf32>
    %12 = vector.extract_strided_slice %7 {offsets = [0, 0], sizes = [4, 32], strides = [1, 1]} : vector<4x256xf32> to vector<4x32xf32>
    %13 = arith.addf %12, %11 : vector<4x32xf32>
    %c0_12 = arith.constant 0 : index
    %c0_13 = arith.constant 0 : index
    %c0_14 = arith.constant 0 : index
    %14 = vector.load %arg7[%c0_12, %c0_13, %c0_14] : memref<1x4x256xf32, #tpu.memory_space<vmem>>, vector<1x4x32xf32>
    %15 = vector.shape_cast %14 : vector<1x4x32xf32> to vector<4x32xf32>
    %16 = vector.shape_cast %13 : vector<4x32xf32> to vector<1x4x32xf32>
    tpu.vector_store %arg7[%c0_12, %c0_13, %c0_14], %16 {strides = array<i32>} : memref<1x4x256xf32, #tpu.memory_space<vmem>>, vector<1x4x32xf32>,
    %c0_15 = arith.constant 0 : index
    %c0_16 = arith.constant 0 : index
    %c8 = arith.constant 8 : index
    %17 = vector.load %arg2[%c0_15, %c0_16, %c8] : memref<1x4x64xf32, #tpu.memory_space<vmem>>, vector<1x4x8xf32>
    %18 = vector.shape_cast %17 : vector<1x4x8xf32> to vector<4x8xf32>
    %cst_17 = arith.constant dense<0.000000e+00> : vector<4x32xf32>
    %19 = tpu.matmul %18, %8, %cst_17 {dimension_numbers = #tpu.dot_dimension_numbers<[1], [0], [0], [1], [0, 0, 1, 1], [], []>} : vector<4x8xf32>, vector<8x32xf32>, vector<4x32xf32> -> vector<4x32xf32>
    %20 = vector.extract_strided_slice %7 {offsets = [0, 32], sizes = [4, 32], strides = [1, 1]} : vector<4x256xf32> to vector<4x32xf32>
    %21 = arith.addf %20, %19 : vector<4x32xf32>
    %c0_18 = arith.constant 0 : index
    %c0_19 = arith.constant 0 : index
    %c32 = arith.constant 32 : index
    %22 = vector.load %arg7[%c0_18, %c0_19, %c32] : memref<1x4x256xf32, #tpu.memory_space<vmem>>, vector<1x4x32xf32>
    %23 = vector.shape_cast %22 : vector<1x4x32xf32> to vector<4x32xf32>
    %24 = vector.shape_cast %21 : vector<4x32xf32> to vector<1x4x32xf32>
    tpu.vector_store %arg7[%c0_18, %c0_19, %c32], %24 {strides = array<i32>} : memref<1x4x256xf32, #tpu.memory_space<vmem>>, vector<1x4x32xf32>,
    %c0_20 = arith.constant 0 : index
    %c0_21 = arith.constant 0 : index
    %c16 = arith.constant 16 : index
    %25 = vector.load %arg2[%c0_20, %c0_21, %c16] : memref<1x4x64xf32, #tpu.memory_space<vmem>>, vector<1x4x8xf32>
    %26 = vector.shape_cast %25 : vector<1x4x8xf32> to vector<4x8xf32>
    %cst_22 = arith.constant dense<0.000000e+00> : vector<4x32xf32>
    %27 = tpu.matmul %26, %8, %cst_22 {dimension_numbers = #tpu.dot_dimension_numbers<[1], [0], [0], [1], [0, 0, 1, 1], [], []>} : vector<4x8xf32>, vector<8x32xf32>, vector<4x32xf32> -> vector<4x32xf32>
    %28 = vector.extract_strided_slice %7 {offsets = [0, 64], sizes = [4, 32], strides = [1, 1]} : vector<4x256xf32> to vector<4x32xf32>
    %29 = arith.addf %28, %27 : vector<4x32xf32>
    %c0_23 = arith.constant 0 : index
    %c0_24 = arith.constant 0 : index
    %c64 = arith.constant 64 : index
    %30 = vector.load %arg7[%c0_23, %c0_24, %c64] : memref<1x4x256xf32, #tpu.memory_space<vmem>>, vector<1x4x32xf32>
    %31 = vector.shape_cast %30 : vector<1x4x32xf32> to vector<4x32xf32>
    %32 = vector.shape_cast %29 : vector<4x32xf32> to vector<1x4x32xf32>
    tpu.vector_store %arg7[%c0_23, %c0_24, %c64], %32 {strides = array<i32>} : memref<1x4x256xf32, #tpu.memory_space<vmem>>, vector<1x4x32xf32>,
    %c0_25 = arith.constant 0 : index
    %c0_26 = arith.constant 0 : index
    %c24 = arith.constant 24 : index
    %33 = vector.load %arg2[%c0_25, %c0_26, %c24] : memref<1x4x64xf32, #tpu.memory_space<vmem>>, vector<1x4x8xf32>
    %34 = vector.shape_cast %33 : vector<1x4x8xf32> to vector<4x8xf32>
    %cst_27 = arith.constant dense<0.000000e+00> : vector<4x32xf32>
    %35 = tpu.matmul %34, %8, %cst_27 {dimension_numbers = #tpu.dot_dimension_numbers<[1], [0], [0], [1], [0, 0, 1, 1], [], []>} : vector<4x8xf32>, vector<8x32xf32>, vector<4x32xf32> -> vector<4x32xf32>
    %36 = vector.extract_strided_slice %7 {offsets = [0, 96], sizes = [4, 32], strides = [1, 1]} : vector<4x256xf32> to vector<4x32xf32>
    %37 = arith.addf %36, %35 : vector<4x32xf32>
    %c0_28 = arith.constant 0 : index
    %c0_29 = arith.constant 0 : index
    %c96 = arith.constant 96 : index
    %38 = vector.load %arg7[%c0_28, %c0_29, %c96] : memref<1x4x256xf32, #tpu.memory_space<vmem>>, vector<1x4x32xf32>
    %39 = vector.shape_cast %38 : vector<1x4x32xf32> to vector<4x32xf32>
    %40 = vector.shape_cast %37 : vector<4x32xf32> to vector<1x4x32xf32>
    tpu.vector_store %arg7[%c0_28, %c0_29, %c96], %40 {strides = array<i32>} : memref<1x4x256xf32, #tpu.memory_space<vmem>>, vector<1x4x32xf32>,
    %c0_30 = arith.constant 0 : index
    %c0_31 = arith.constant 0 : index
    %c32_32 = arith.constant 32 : index
    %41 = vector.load %arg2[%c0_30, %c0_31, %c32_32] : memref<1x4x64xf32, #tpu.memory_space<vmem>>, vector<1x4x8xf32>
    %42 = vector.shape_cast %41 : vector<1x4x8xf32> to vector<4x8xf32>
    %cst_33 = arith.constant dense<0.000000e+00> : vector<4x32xf32>
    %43 = tpu.matmul %42, %8, %cst_33 {dimension_numbers = #tpu.dot_dimension_numbers<[1], [0], [0], [1], [0, 0, 1, 1], [], []>} : vector<4x8xf32>, vector<8x32xf32>, vector<4x32xf32> -> vector<4x32xf32>
    %44 = vector.extract_strided_slice %7 {offsets = [0, 128], sizes = [4, 32], strides = [1, 1]} : vector<4x256xf32> to vector<4x32xf32>
    %45 = arith.addf %44, %43 : vector<4x32xf32>
    %c0_34 = arith.constant 0 : index
    %c0_35 = arith.constant 0 : index
    %c128 = arith.constant 128 : index
    %46 = vector.load %arg7[%c0_34, %c0_35, %c128] : memref<1x4x256xf32, #tpu.memory_space<vmem>>, vector<1x4x32xf32>
    %47 = vector.shape_cast %46 : vector<1x4x32xf32> to vector<4x32xf32>
    %48 = vector.shape_cast %45 : vector<4x32xf32> to vector<1x4x32xf32>
    tpu.vector_store %arg7[%c0_34, %c0_35, %c128], %48 {strides = array<i32>} : memref<1x4x256xf32, #tpu.memory_space<vmem>>, vector<1x4x32xf32>,
    %c0_36 = arith.constant 0 : index
    %c0_37 = arith.constant 0 : index
    %c40 = arith.constant 40 : index
    %49 = vector.load %arg2[%c0_36, %c0_37, %c40] : memref<1x4x64xf32, #tpu.memory_space<vmem>>, vector<1x4x8xf32>
    %50 = vector.shape_cast %49 : vector<1x4x8xf32> to vector<4x8xf32>
    %cst_38 = arith.constant dense<0.000000e+00> : vector<4x32xf32>
    %51 = tpu.matmul %50, %8, %cst_38 {dimension_numbers = #tpu.dot_dimension_numbers<[1], [0], [0], [1], [0, 0, 1, 1], [], []>} : vector<4x8xf32>, vector<8x32xf32>, vector<4x32xf32> -> vector<4x32xf32>
    %52 = vector.extract_strided_slice %7 {offsets = [0, 160], sizes = [4, 32], strides = [1, 1]} : vector<4x256xf32> to vector<4x32xf32>
    %53 = arith.addf %52, %51 : vector<4x32xf32>
    %c0_39 = arith.constant 0 : index
    %c0_40 = arith.constant 0 : index
    %c160 = arith.constant 160 : index
    %54 = vector.load %arg7[%c0_39, %c0_40, %c160] : memref<1x4x256xf32, #tpu.memory_space<vmem>>, vector<1x4x32xf32>
    %55 = vector.shape_cast %54 : vector<1x4x32xf32> to vector<4x32xf32>
    %56 = vector.shape_cast %53 : vector<4x32xf32> to vector<1x4x32xf32>
    tpu.vector_store %arg7[%c0_39, %c0_40, %c160], %56 {strides = array<i32>} : memref<1x4x256xf32, #tpu.memory_space<vmem>>, vector<1x4x32xf32>,
    %c0_41 = arith.constant 0 : index
    %c0_42 = arith.constant 0 : index
    %c48 = arith.constant 48 : index
    %57 = vector.load %arg2[%c0_41, %c0_42, %c48] : memref<1x4x64xf32, #tpu.memory_space<vmem>>, vector<1x4x8xf32>
    %58 = vector.shape_cast %57 : vector<1x4x8xf32> to vector<4x8xf32>
    %cst_43 = arith.constant dense<0.000000e+00> : vector<4x32xf32>
    %59 = tpu.matmul %58, %8, %cst_43 {dimension_numbers = #tpu.dot_dimension_numbers<[1], [0], [0], [1], [0, 0, 1, 1], [], []>} : vector<4x8xf32>, vector<8x32xf32>, vector<4x32xf32> -> vector<4x32xf32>
    %60 = vector.extract_strided_slice %7 {offsets = [0, 192], sizes = [4, 32], strides = [1, 1]} : vector<4x256xf32> to vector<4x32xf32>
    %61 = arith.addf %60, %59 : vector<4x32xf32>
    %c0_44 = arith.constant 0 : index
    %c0_45 = arith.constant 0 : index
    %c192 = arith.constant 192 : index
    %62 = vector.load %arg7[%c0_44, %c0_45, %c192] : memref<1x4x256xf32, #tpu.memory_space<vmem>>, vector<1x4x32xf32>
    %63 = vector.shape_cast %62 : vector<1x4x32xf32> to vector<4x32xf32>
    %64 = vector.shape_cast %61 : vector<4x32xf32> to vector<1x4x32xf32>
    tpu.vector_store %arg7[%c0_44, %c0_45, %c192], %64 {strides = array<i32>} : memref<1x4x256xf32, #tpu.memory_space<vmem>>, vector<1x4x32xf32>,
    %c0_46 = arith.constant 0 : index
    %c0_47 = arith.constant 0 : index
    %c56 = arith.constant 56 : index
    %65 = vector.load %arg2[%c0_46, %c0_47, %c56] : memref<1x4x64xf32, #tpu.memory_space<vmem>>, vector<1x4x8xf32>
    %66 = vector.shape_cast %65 : vector<1x4x8xf32> to vector<4x8xf32>
    %cst_48 = arith.constant dense<0.000000e+00> : vector<4x32xf32>
    %67 = tpu.matmul %66, %8, %cst_48 {dimension_numbers = #tpu.dot_dimension_numbers<[1], [0], [0], [1], [0, 0, 1, 1], [], []>} : vector<4x8xf32>, vector<8x32xf32>, vector<4x32xf32> -> vector<4x32xf32>
    %68 = vector.extract_strided_slice %7 {offsets = [0, 224], sizes = [4, 32], strides = [1, 1]} : vector<4x256xf32> to vector<4x32xf32>
    %69 = arith.addf %68, %67 : vector<4x32xf32>
    %c0_49 = arith.constant 0 : index
    %c0_50 = arith.constant 0 : index
    %c224 = arith.constant 224 : index
    %70 = vector.load %arg7[%c0_49, %c0_50, %c224] : memref<1x4x256xf32, #tpu.memory_space<vmem>>, vector<1x4x32xf32>
    %71 = vector.shape_cast %70 : vector<1x4x32xf32> to vector<4x32xf32>
    %72 = vector.shape_cast %69 : vector<4x32xf32> to vector<1x4x32xf32>
    tpu.vector_store %arg7[%c0_49, %c0_50, %c224], %72 {strides = array<i32>} : memref<1x4x256xf32, #tpu.memory_space<vmem>>, vector<1x4x32xf32>,
    return
  }
  func.func @transform_0(%arg0: i32, %arg1: i32) -> (i32, i32, i32) {
    %c0_i32 = arith.constant 0 : i32
    %c0_i32_0 = arith.constant 0 : i32
    return %arg0, %c0_i32, %arg1 : i32, i32, i32
  }
  func.func @transform_1(%arg0: i32, %arg1: i32) -> (i32, i32, i32) {
    %c0_i32 = arith.constant 0 : i32
    %c0_i32_0 = arith.constant 0 : i32
    return %arg0, %c0_i32, %arg1 : i32, i32, i32
  }
  func.func @transform_2(%arg0: i32, %arg1: i32) -> (i32, i32) {
    %c0_i32 = arith.constant 0 : i32
    %c0_i32_0 = arith.constant 0 : i32
    %c0_i32_1 = arith.constant 0 : i32
    return %c0_i32, %c0_i32_0 : i32, i32
  }
  func.func @transform_3(%arg0: i32, %arg1: i32) -> (i32, i32) {
    %c0_i32 = arith.constant 0 : i32
    %c0_i32_0 = arith.constant 0 : i32
    %c0_i32_1 = arith.constant 0 : i32
    return %c0_i32, %c0_i32_0 : i32, i32
  }
  func.func @transform_4(%arg0: i32, %arg1: i32) -> (i32, i32) {
    %c0_i32 = arith.constant 0 : i32
    %c0_i32_0 = arith.constant 0 : i32
    %c0_i32_1 = arith.constant 0 : i32
    return %c0_i32, %c0_i32_0 : i32, i32
  }
  func.func @transform_5(%arg0: i32, %arg1: i32) -> (i32, i32, i32) {
    %c0_i32 = arith.constant 0 : i32
    %c0_i32_0 = arith.constant 0 : i32
    return %arg0, %c0_i32, %arg1 : i32, i32, i32
  }
}

</mosaic_0001>

<llo_original>
// kernel: fpn_block_pallas.1
$region0: #{fpn_block_pallas.1}
  #allocation0 [shape = 'u32[]', space=smem, size = 0x4, offset = 0x4, fixed_abs, tag = 'smem constant byte address 0x4 - core index']
  #allocation1 [shape = 'u32[144,128]{1,0:T(1,128)}', space=vmem, size = 0x12000, scoped, tag = 'internal scratch']
  %s0 = inlined_call_operand.vmem [shape: f32[2,4,64], index: 0, kind: input, shape index: {}]
  %s1 = inlined_call_operand.vmem [shape: f32[2,4,256], index: 1, kind: input, shape index: {}]
  %s2 = inlined_call_operand.vmem [shape: bf16[4,4], index: 2, kind: input, shape index: {}]
  %s3 = inlined_call_operand.vmem [shape: f32[4,1], index: 3, kind: input, shape index: {}]
  %s4 = inlined_call_operand.vmem [shape: f32[8,32], index: 4, kind: input, shape index: {}]
  %s5 = inlined_call_operand.vmem [shape: f32[2,4,256], index: 5, kind: output, shape index: {}]
  %s6 = sld [smem:[#allocation0]]
  $region53: #{fpn_block_pallas.1} parent=0
    _
  %s8 = ssub.s32 1, %s6
  %s9 = scalar_select 0, %s8, %s6
  loop: start=0, step=1, limit=4
  $region2: #{fpn_block_pallas.1} parent=0 // loop_pre_header
    _
  $region3: #{fpn_block_pallas.1} parent=0 // loop_header
    %s11 = sphi 0, %s15
    %p12 = scmp.ge.s32.totalorder %s11, 4
    %s18 = sphi 0, %s30
    %s19 = sphi 0, %s26
    %s20 = sphi 0, %s18
    %s21 = sphi 0, %s19
    %s22 = sphi 0, %s20
    %s23 = sphi 0, %s21
    %s35 = sphi 0, %s37
    %s38 = sphi 0, %s35
    %s39 = sphi 0, %s38
    %s55 = sphi 0, %s39
    %s63 = sphi 0, %s65
    %s66 = sphi 0, %s63
    %s67 = sphi 0, %s66
    %s83 = sphi 0, %s67
    %s87 = sphi 0, %s87
    %s89 = sphi 0, %s87
    %s90 = sphi 0, %s89
    %s104 = sphi 0, %s90
    %s108 = sphi 0, %s108
    %s110 = sphi 0, %s108
    %s111 = sphi 0, %s110
    %s125 = sphi 0, %s111
    %s129 = sphi 0, %s129
    %s131 = sphi 0, %s129
    %s132 = sphi 0, %s131
    %s146 = sphi 0, %s132
    %s154 = sphi 0, %s156
    %s157 = sphi 0, %s154
    %s158 = sphi 0, %s157
    %s174 = sphi 0, %s158
  $region4: #{fpn_block_pallas.1} parent=0 // loop_header_branch
    %14 = sbr.rel (%p12) target = $region8
  $region5: #{fpn_block_pallas.1} parent=0 // loop_body
    %s16 = ssub.s32 %s11, 1
    %s17 = ssub.s32 %s11, 2
    %s24 = sadd.s32 1, %s19
    %p25 = scmp.ge.s32.totalorder %s24, 1
    %s26 = scalar_select %p25, 0, %s24
    %s27 = sadd.s32 1, %s18
    %s28 = scalar_select %p25, %s27, %s18
    %p29 = scmp.ge.s32.totalorder %s28, 2
    %s30 = scalar_select %p29, 0, %s28
    %s31 = ssub.s32 %s18, %s30
    %s32 = ssub.s32 %s19, %s26
    %s33 = sor.u32 %s31, %s32
    %p34 = scmp.eq.s32.totalorder %s33, 0
    %s36 = sadd.s32 %s35, 1
    %s37 = scalar_select %p34, %s35, %s36
    %p40 = pneg %p34
    %p41 = scmp.eq.s32.totalorder %s11, 1
    %p42 = por %p40, %p41
    %p43 = scmp.ne.s32.totalorder %s35, %s38
    %p44 = scmp.eq.s32.totalorder %s11, 0
    %p45 = por %p43, %p44
    %p46 = scmp.ne.s32.totalorder %s35, %s38
    %p47 = scmp.eq.s32.totalorder %s16, 1
    %p48 = por %p46, %p47
    %p49 = scmp.ne.s32.totalorder %s38, %s39
    %p50 = scmp.eq.s32.totalorder %s16, 0
    %p51 = por %p49, %p50
    %p52 = scmp.ne.s32.totalorder %s38, %s39
    %p53 = scmp.eq.s32.totalorder %s17, 1
    %p54 = por %p52, %p53
    %p56 = scmp.ne.s32.totalorder %s39, %s55
    %p57 = scmp.eq.s32.totalorder %s17, 0
    %p58 = por %p56, %p57
    %s59 = ssub.s32 %s18, %s30
    %s60 = ssub.s32 %s19, %s26
    %s61 = sor.u32 %s59, %s60
    %p62 = scmp.eq.s32.totalorder %s61, 0
    %s64 = sadd.s32 %s63, 1
    %s65 = scalar_select %p62, %s63, %s64
    %p68 = pneg %p62
    %p69 = scmp.eq.s32.totalorder %s11, 1
    %p70 = por %p68, %p69
    %p71 = scmp.ne.s32.totalorder %s63, %s66
    %p72 = scmp.eq.s32.totalorder %s11, 0
    %p73 = por %p71, %p72
    %p74 = scmp.ne.s32.totalorder %s63, %s66
    %p75 = scmp.eq.s32.totalorder %s16, 1
    %p76 = por %p74, %p75
    %p77 = scmp.ne.s32.totalorder %s66, %s67
    %p78 = scmp.eq.s32.totalorder %s16, 0
    %p79 = por %p77, %p78
    %p80 = scmp.ne.s32.totalorder %s66, %s67
    %p81 = scmp.eq.s32.totalorder %s17, 1
    %p82 = por %p80, %p81
    %p84 = scmp.ne.s32.totalorder %s67, %s83
    %p85 = scmp.eq.s32.totalorder %s17, 0
    %p86 = por %p84, %p85
    %s88 = sadd.s32 %s87, 1
    %p91 = scmp.eq.s32.totalorder %s11, 1
    %p92 = scmp.ne.s32.totalorder %s87, %s89
    %p93 = scmp.eq.s32.totalorder %s11, 0
    %p94 = por %p92, %p93
    %p95 = scmp.ne.s32.totalorder %s87, %s89
    %p96 = scmp.eq.s32.totalorder %s16, 1
    %p97 = por %p95, %p96
    %p98 = scmp.ne.s32.totalorder %s89, %s90
    %p99 = scmp.eq.s32.totalorder %s16, 0
    %p100 = por %p98, %p99
    %p101 = scmp.ne.s32.totalorder %s89, %s90
    %p102 = scmp.eq.s32.totalorder %s17, 1
    %p103 = por %p101, %p102
    %p105 = scmp.ne.s32.totalorder %s90, %s104
    %p106 = scmp.eq.s32.totalorder %s17, 0
    %p107 = por %p105, %p106
    %s109 = sadd.s32 %s108, 1
    %p112 = scmp.eq.s32.totalorder %s11, 1
    %p113 = scmp.ne.s32.totalorder %s108, %s110
    %p114 = scmp.eq.s32.totalorder %s11, 0
    %p115 = por %p113, %p114
    %p116 = scmp.ne.s32.totalorder %s108, %s110
    %p117 = scmp.eq.s32.totalorder %s16, 1
    %p118 = por %p116, %p117
    %p119 = scmp.ne.s32.totalorder %s110, %s111
    %p120 = scmp.eq.s32.totalorder %s16, 0
    %p121 = por %p119, %p120
    %p122 = scmp.ne.s32.totalorder %s110, %s111
    %p123 = scmp.eq.s32.totalorder %s17, 1
    %p124 = por %p122, %p123
    %p126 = scmp.ne.s32.totalorder %s111, %s125
    %p127 = scmp.eq.s32.totalorder %s17, 0
    %p128 = por %p126, %p127
    %s130 = sadd.s32 %s129, 1
    %p133 = scmp.eq.s32.totalorder %s11, 1
    %p134 = scmp.ne.s32.totalorder %s129, %s131
    %p135 = scmp.eq.s32.totalorder %s11, 0
    %p136 = por %p134, %p135
    %p137 = scmp.ne.s32.totalorder %s129, %s131
    %p138 = scmp.eq.s32.totalorder %s16, 1
    %p139 = por %p137, %p138
    %p140 = scmp.ne.s32.totalorder %s131, %s132
    %p141 = scmp.eq.s32.totalorder %s16, 0
    %p142 = por %p140, %p141
    %p143 = scmp.ne.s32.totalorder %s131, %s132
    %p144 = scmp.eq.s32.totalorder %s17, 1
    %p145 = por %p143, %p144
    %p147 = scmp.ne.s32.totalorder %s132, %s146
    %p148 = scmp.eq.s32.totalorder %s17, 0
    %p149 = por %p147, %p148
    %s150 = ssub.s32 %s18, %s30
    %s151 = ssub.s32 %s19, %s26
    %s152 = sor.u32 %s150, %s151
    %p153 = scmp.eq.s32.totalorder %s152, 0
    %s155 = sadd.s32 %s154, 1
    %s156 = scalar_select %p153, %s154, %s155
    %p159 = pneg %p153
    %p160 = scmp.eq.s32.totalorder %s11, 1
    %p161 = por %p159, %p160
    %p162 = scmp.ne.s32.totalorder %s154, %s157
    %p163 = scmp.eq.s32.totalorder %s11, 0
    %p164 = por %p162, %p163
    %p165 = scmp.ne.s32.totalorder %s154, %s157
    %p166 = scmp.eq.s32.totalorder %s16, 1
    %p167 = por %p165, %p166
    %p168 = scmp.ne.s32.totalorder %s157, %s158
    %p169 = scmp.eq.s32.totalorder %s16, 0
    %p170 = por %p168, %p169
    %p171 = scmp.ne.s32.totalorder %s157, %s158
    %p172 = scmp.eq.s32.totalorder %s17, 1
    %p173 = por %p171, %p172
    %p175 = scmp.ne.s32.totalorder %s158, %s174
    %p176 = scmp.eq.s32.totalorder %s17, 0
    %p177 = por %p175, %p176
    %p178 = scmp.le.s32.totalorder 1, %s11
    %p179 = scmp.lt.s32.totalorder %s11, 3
    %p180 = pnand %p178, %p179
    %p181 = pneg %p180
    // Predicated region
    $region9: #{fpn_block_pallas.1} parent=5 // pred_check
      _
    $region10: #{fpn_block_pallas.1} parent=5 // pred_check_branch
      %183 = sbr.rel (%p180) target = $region12
    $region11: #{fpn_block_pallas.1} parent=5 // pred_region
      %s184 = ssub.s32 %s11, 1
      // Predicated region
      $region13: #{fpn_block_pallas.1} parent=11 // pred_check
        %p185 = pneg %p100
      $region14: #{fpn_block_pallas.1} parent=11 // pred_check_branch
        %187 = sbr.rel (%p185) target = $region16
      $region15: #{fpn_block_pallas.1} parent=11 // pred_region
        _
      $region16: #{fpn_block_pallas.1} parent=11 // pred_fallthru
        _
      // Predicated region
      $region17: #{fpn_block_pallas.1} parent=11 // pred_check
        %p188 = pneg %p121
      $region18: #{fpn_block_pallas.1} parent=11 // pred_check_branch
        %190 = sbr.rel (%p188) target = $region20
      $region19: #{fpn_block_pallas.1} parent=11 // pred_region
        _
      $region20: #{fpn_block_pallas.1} parent=11 // pred_fallthru
        _
      // Predicated region
      $region21: #{fpn_block_pallas.1} parent=11 // pred_check
        %p191 = pneg %p142
      $region22: #{fpn_block_pallas.1} parent=11 // pred_check_branch
        %193 = sbr.rel (%p191) target = $region24
      $region23: #{fpn_block_pallas.1} parent=11 // pred_region
        _
      $region24: #{fpn_block_pallas.1} parent=11 // pred_fallthru
        _
    $region12: #{fpn_block_pallas.1} parent=5 // pred_fallthru
      _
    %p194 = scmp.lt.s32.totalorder %s11, 2
    // Predicated region
    $region25: #{fpn_block_pallas.1} parent=5 // pred_check
      %p195 = pneg %p194
    $region26: #{fpn_block_pallas.1} parent=5 // pred_check_branch
      %197 = sbr.rel (%p195) target = $region28
    $region27: #{fpn_block_pallas.1} parent=5 // pred_region
      // Predicated region
      $region29: #{fpn_block_pallas.1} parent=27 // pred_check
        %p198 = pneg %p45
      $region30: #{fpn_block_pallas.1} parent=27 // pred_check_branch
        %200 = sbr.rel (%p198) target = $region32
      $region31: #{fpn_block_pallas.1} parent=27 // pred_region
        %p201 = scmp.lt.s32.totalorder %s18, 1
        %s202 = scalar_select %p201, %s18, 1
        %p203 = scmp.lt.s32.totalorder %s19, 0
        %s204 = scalar_select %p203, %s19, 0
        %s205 = sadd.s32 %s204, %s202
        %s206 = smul.addr %s205, 4
        %s207 = scalar_lea.vmem %s0, %s206
      $region32: #{fpn_block_pallas.1} parent=27 // pred_fallthru
        _
      // Predicated region
      $region33: #{fpn_block_pallas.1} parent=27 // pred_check
        %p208 = pneg %p73
      $region34: #{fpn_block_pallas.1} parent=27 // pred_check_branch
        %210 = sbr.rel (%p208) target = $region36
      $region35: #{fpn_block_pallas.1} parent=27 // pred_region
        %s211 = smul.u32 2, %s19
        %p212 = scmp.lt.s32.totalorder %s18, 1
        %s213 = scalar_select %p212, %s18, 1
        %p214 = scmp.lt.s32.totalorder %s211, 1
        %s215 = scalar_select %p214, %s211, 1
        %s216 = smul.addr %s213, 2
        %s217 = sadd.s32 %s215, %s216
        %s218 = smul.addr %s217, 4
        %s219 = scalar_lea.vmem %s1, %s218
        %s220 = smul.u32 2, %s19
      $region36: #{fpn_block_pallas.1} parent=27 // pred_fallthru
        _
    $region28: #{fpn_block_pallas.1} parent=5 // pred_fallthru
      _
    %p221 = scmp.le.s32.totalorder 1, %s11
    %p222 = scmp.lt.s32.totalorder %s11, 3
    %p223 = pnand %p221, %p222
    %p224 = pneg %p223
    // Predicated region
    $region37: #{fpn_block_pallas.1} parent=5 // pred_check
      _
    $region38: #{fpn_block_pallas.1} parent=5 // pred_check_branch
      %226 = sbr.rel (%p223) target = $region40
    $region39: #{fpn_block_pallas.1} parent=5 // pred_region
      %s227 = ssub.s32 %s11, 1
      %p228 = scmp.lt.s32.totalorder %s20, 1
      %s229 = scalar_select %p228, %s20, 1
      %p230 = scmp.lt.s32.totalorder %s21, 0
      %s231 = scalar_select %p230, %s21, 0
      %s232 = sadd.s32 %s231, %s229
      %s233 = smul.addr %s232, 4
      %s234 = scalar_lea.vmem %s0, %s233
      %p235 = pneg %p51
      %p236 = pneg %p48
      %s237 = smul.u32 2, %s21
      %p238 = scmp.lt.s32.totalorder %s20, 1
      %s239 = scalar_select %p238, %s20, 1
      %p240 = scmp.lt.s32.totalorder %s237, 1
      %s241 = scalar_select %p240, %s237, 1
      %s242 = smul.addr %s239, 2
      %s243 = sadd.s32 %s241, %s242
      %s244 = smul.addr %s243, 4
      %s245 = scalar_lea.vmem %s1, %s244
      %p246 = pneg %p79
      %p247 = pneg %p76
      %p248 = pneg %p100
      %p249 = pneg %p97
      %p250 = pneg %p121
      %p251 = pneg %p118
      %p252 = pneg %p142
      %p253 = pneg %p139
      %p254 = pneg %p170
      %p255 = pneg %p167
      %s256 = smul.u32 2, %s21
      %p257 = scmp.lt.s32.totalorder %s20, 1
      %s258 = scalar_select %p257, %s20, 1
      %p259 = scmp.lt.s32.totalorder %s256, 1
      %s260 = scalar_select %p259, %s256, 1
      %s261 = smul.addr %s258, 2
      %s262 = sadd.s32 %s260, %s261
      %s263 = smul.addr %s262, 4
      %s264 = scalar_lea.vmem %s5, %s263
      %p265 = scmp.lt.s32.totalorder %s20, 1
      %s266 = scalar_select %p265, %s20, 1
      %p267 = scmp.lt.s32.totalorder %s21, 0
      %s268 = scalar_select %p267, %s21, 0
      %s269 = sadd.s32 %s268, %s266
      %s270 = smul.addr %s269, 4
      %s271 = scalar_lea.vmem %s0, %s270
      %s272 = smul.u32 2, %s21
      %p273 = scmp.lt.s32.totalorder %s20, 1
      %s274 = scalar_select %p273, %s20, 1
      %p275 = scmp.lt.s32.totalorder %s272, 1
      %s276 = scalar_select %p275, %s272, 1
      %s277 = smul.addr %s274, 2
      %s278 = sadd.s32 %s276, %s277
      %s279 = smul.addr %s278, 4
      %s280 = scalar_lea.vmem %s1, %s279
      %s281 = smul.u32 2, %s21
      %s282 = smul.u32 2, %s21
      %p283 = scmp.lt.s32.totalorder %s20, 1
      %s284 = scalar_select %p283, %s20, 1
      %p285 = scmp.lt.s32.totalorder %s282, 1
      %s286 = scalar_select %p285, %s282, 1
      %s287 = smul.addr %s284, 2
      %s288 = sadd.s32 %s286, %s287
      %s289 = smul.addr %s288, 4
      %s290 = scalar_lea.vmem %s5, %s289
      %s291 = smul.u32 2, %s21
      %v293 = vld [vmem:[%s2] sm:$0x3]
      %v294 = vld [vmem:[%s280] sm:$0xff]
      %v296 = vcombine.high %v294, %v294
      %v298 = vpack.c.bf16 %v294, %v294
      %v299 = vpack.c.bf16 %v296, %v296
      %v300 = vld [vmem:[%s3] sm:$0xf]
      %302 = vset.pattern.permute.xlu0 0
      %303 = vperm.xlu0 %302, %v300
      %v304 = vpop.permute.xlu0 %303
      %vm306 = vcmask 31744
      %v308 = vsel %vm306, %v293, 0
      %vm310 = vcmask 1041408
      %v312 = vsel %vm310, %v298, 0
      %v315 = vsel %vm310, %v299, 0
      %317 = vmatprep.subr.bf16.mxu0 %v315
      %318 = vmatpush1.bf16.msra.mxu0 %v312
      %319 = vmatprep.subr.bf16.mxu0 0
      %320 = vmatpush1.bf16.msra.mxu0 0
      %321 = vmatprep.subr.bf16.mxu0 0
      %322 = vmatpush1.bf16.msra.mxu0 0
      %323 = vmatprep.subr.bf16.mxu0 0
      %324 = vmatpush1.bf16.msra.mxu0 0
      %325 = vmatprep.subr.bf16.mxu0 0
      %326 = vmatpush1.bf16.msra.mxu0 0
      %327 = vmatprep.subr.bf16.mxu0 0
      %328 = vmatpush1.bf16.msra.mxu0 0
      %329 = vmatprep.subr.bf16.mxu0 0
      %330 = vmatpush1.bf16.msra.mxu0 0
      %331 = vmatprep.subr.bf16.mxu0 0
      %332 = vmatpush1.bf16.msra.mxu0 0
      %333 = vmatprep.subr.bf16.mxu0 0
      %334 = vmatpush1.bf16.msra.mxu0 0
      %335 = vmatprep.subr.bf16.mxu0 0
      %336 = vmatpush1.bf16.msra.mxu0 0
      %337 = vmatprep.subr.bf16.mxu0 0
      %338 = vmatpush1.bf16.msra.mxu0 0
      %339 = vmatprep.subr.bf16.mxu0 0
      %340 = vmatpush1.bf16.msra.mxu0 0
      %341 = vmatprep.subr.bf16.mxu0 0
      %342 = vmatpush1.bf16.msra.mxu0 0
      %343 = vmatprep.subr.bf16.mxu0 0
      %344 = vmatpush1.bf16.msra.mxu0 0
      %345 = vmatprep.subr.bf16.mxu0 0
      %346 = vmatpush1.bf16.msra.mxu0 0
      %347 = vmatprep.subr.bf16.mxu0 0
      %348 = vmatpush1.bf16.msra.mxu0 0
      %349 = vmatprep.mubr.bf16.mxu0 0
      %350 = vmatmul.mubr.bf16.gmra.mrb[0].mxu0 %v308
      %v351 = vpop.f32.mrb[0].mxu0
      %v352 = vadd.f32 %v304, %v351
      %v353 = vpop.f32.mrb[0].mxu0
      %v354 = vadd.f32 %v304, %v353
      %v355 = vpop.f32.mrb[0].mxu0
      %v356 = vpop.f32.mrb[0].mxu0
      %357 = vdwg.mxu0
      %v358 = vld [vmem:[%s4] sm:$0xff]
      %v359 = vld [vmem:[%s271] sm:$0xf]
      %vm360 = vcmask 64512
      %v362 = vsel %vm360, %v359, 0
      %364 = vmatprep.subr.mxu0 0.0
      %365 = vmatpush1.msra.mxu0 %v358
      %366 = vmatprep.subr.mxu0 0.0
      %367 = vmatpush1.msra.mxu0 0.0
      %368 = vmatprep.subr.mxu0 0.0
      %369 = vmatpush1.msra.mxu0 0.0
      %370 = vmatprep.subr.mxu0 0.0
      %371 = vmatpush1.msra.mxu0 0.0
      %372 = vmatprep.subr.mxu0 0.0
      %373 = vmatpush1.msra.mxu0 0.0
      %374 = vmatprep.subr.mxu0 0.0
      %375 = vmatpush1.msra.mxu0 0.0
      %376 = vmatprep.subr.mxu0 0.0
      %377 = vmatpush1.msra.mxu0 0.0
      %378 = vmatprep.subr.mxu0 0.0
      %379 = vmatpush1.msra.mxu0 0.0
      %380 = vmatprep.subr.mxu0 0.0
      %381 = vmatpush1.msra.mxu0 0.0
      %382 = vmatprep.subr.mxu0 0.0
      %383 = vmatpush1.msra.mxu0 0.0
      %384 = vmatprep.subr.mxu0 0.0
      %385 = vmatpush1.msra.mxu0 0.0
      %386 = vmatprep.subr.mxu0 0.0
      %387 = vmatpush1.msra.mxu0 0.0
      %388 = vmatprep.subr.mxu0 0.0
      %389 = vmatpush1.msra.mxu0 0.0
      %390 = vmatprep.subr.mxu0 0.0
      %391 = vmatpush1.msra.mxu0 0.0
      %392 = vmatprep.subr.mxu0 0.0
      %393 = vmatpush1.msra.mxu0 0.0
      %394 = vmatprep.subr.mxu0 0.0
      %395 = vmatpush1.msra.mxu0 0.0
      %396 = vmatprep.subr.mxu0 0.0
      %397 = vmatpush1.msra.mxu0 0.0
      %398 = vmatprep.subr.mxu0 0.0
      %399 = vmatpush1.msra.mxu0 0.0
      %400 = vmatprep.subr.mxu0 0.0
      %401 = vmatpush1.msra.mxu0 0.0
      %402 = vmatprep.subr.mxu0 0.0
      %403 = vmatpush1.msra.mxu0 0.0
      %404 = vmatprep.subr.mxu0 0.0
      %405 = vmatpush1.msra.mxu0 0.0
      %406 = vmatprep.subr.mxu0 0.0
      %407 = vmatpush1.msra.mxu0 0.0
      %408 = vmatprep.subr.mxu0 0.0
      %409 = vmatpush1.msra.mxu0 0.0
      %410 = vmatprep.subr.mxu0 0.0
      %411 = vmatpush1.msra.mxu0 0.0
      %412 = vmatprep.subr.mxu0 0.0
      %413 = vmatpush1.msra.mxu0 0.0
      %414 = vmatprep.subr.mxu0 0.0
      %415 = vmatpush1.msra.mxu0 0.0
      %416 = vmatprep.subr.mxu0 0.0
      %417 = vmatpush1.msra.mxu0 0.0
      %418 = vmatprep.subr.mxu0 0.0
      %419 = vmatpush1.msra.mxu0 0.0
      %420 = vmatprep.subr.mxu0 0.0
      %421 = vmatpush1.msra.mxu0 0.0
      %422 = vmatprep.subr.mxu0 0.0
      %423 = vmatpush1.msra.mxu0 0.0
      %424 = vmatprep.subr.mxu0 0.0
      %425 = vmatpush1.msra.mxu0 0.0
      %426 = vmatprep.subr.mxu0 0.0
      %427 = vmatpush1.msra.mxu0 0.0
      %428 = vmatprep.mubr.f32.mxu0 0.0
      %429 = vmatmul.mubr.f32.gmra.mrb[0].mxu0 %v362
      %v430 = vpop.f32.mrb[0].mxu0
      %v431 = vadd.f32 0.0, %v430
      %v432 = vpop.f32.mrb[0].mxu0
      %433 = vdwg.mxu0
      %v434 = vadd.f32 %v352, %v431
      %vm435 = vcmask 257024
      %436 = vst.msk [vmem:[%s290] sm:$0xf] %vm435, %v434
      %v437 = vld [vmem:[%s271] sm:$0xf]
      %439 = vrot.lane.b32.xlu0 %v437, 120
      %v440 = vpop.permute.xlu0 %439
      %v441 = vsel %vm360, %v440, 0
      %443 = vmatprep.subr.mxu0 0.0
      %444 = vmatpush1.msra.mxu0 %v358
      %445 = vmatprep.subr.mxu0 0.0
      %446 = vmatpush1.msra.mxu0 0.0
      %447 = vmatprep.subr.mxu0 0.0
      %448 = vmatpush1.msra.mxu0 0.0
      %449 = vmatprep.subr.mxu0 0.0
      %450 = vmatpush1.msra.mxu0 0.0
      %451 = vmatprep.subr.mxu0 0.0
      %452 = vmatpush1.msra.mxu0 0.0
      %453 = vmatprep.subr.mxu0 0.0
      %454 = vmatpush1.msra.mxu0 0.0
      %455 = vmatprep.subr.mxu0 0.0
      %456 = vmatpush1.msra.mxu0 0.0
      %457 = vmatprep.subr.mxu0 0.0
      %458 = vmatpush1.msra.mxu0 0.0
      %459 = vmatprep.subr.mxu0 0.0
      %460 = vmatpush1.msra.mxu0 0.0
      %461 = vmatprep.subr.mxu0 0.0
      %462 = vmatpush1.msra.mxu0 0.0
      %463 = vmatprep.subr.mxu0 0.0
      %464 = vmatpush1.msra.mxu0 0.0
      %465 = vmatprep.subr.mxu0 0.0
      %466 = vmatpush1.msra.mxu0 0.0
      %467 = vmatprep.subr.mxu0 0.0
      %468 = vmatpush1.msra.mxu0 0.0
      %469 = vmatprep.subr.mxu0 0.0
      %470 = vmatpush1.msra.mxu0 0.0
      %471 = vmatprep.subr.mxu0 0.0
      %472 = vmatpush1.msra.mxu0 0.0
      %473 = vmatprep.subr.mxu0 0.0
      %474 = vmatpush1.msra.mxu0 0.0
      %475 = vmatprep.subr.mxu0 0.0
      %476 = vmatpush1.msra.mxu0 0.0
      %477 = vmatprep.subr.mxu0 0.0
      %478 = vmatpush1.msra.mxu0 0.0
      %479 = vmatprep.subr.mxu0 0.0
      %480 = vmatpush1.msra.mxu0 0.0
      %481 = vmatprep.subr.mxu0 0.0
      %482 = vmatpush1.msra.mxu0 0.0
      %483 = vmatprep.subr.mxu0 0.0
      %484 = vmatpush1.msra.mxu0 0.0
      %485 = vmatprep.subr.mxu0 0.0
      %486 = vmatpush1.msra.mxu0 0.0
      %487 = vmatprep.subr.mxu0 0.0
      %488 = vmatpush1.msra.mxu0 0.0
      %489 = vmatprep.subr.mxu0 0.0
      %490 = vmatpush1.msra.mxu0 0.0
      %491 = vmatprep.subr.mxu0 0.0
      %492 = vmatpush1.msra.mxu0 0.0
      %493 = vmatprep.subr.mxu0 0.0
      %494 = vmatpush1.msra.mxu0 0.0
      %495 = vmatprep.subr.mxu0 0.0
      %496 = vmatpush1.msra.mxu0 0.0
      %497 = vmatprep.subr.mxu0 0.0
      %498 = vmatpush1.msra.mxu0 0.0
      %499 = vmatprep.subr.mxu0 0.0
      %500 = vmatpush1.msra.mxu0 0.0
      %501 = vmatprep.subr.mxu0 0.0
      %502 = vmatpush1.msra.mxu0 0.0
      %503 = vmatprep.subr.mxu0 0.0
      %504 = vmatpush1.msra.mxu0 0.0
      %505 = vmatprep.subr.mxu0 0.0
      %506 = vmatpush1.msra.mxu0 0.0
      %507 = vmatprep.mubr.f32.mxu0 0.0
      %508 = vmatmul.mubr.f32.gmra.mrb[0].mxu0 %v441
      %v509 = vpop.f32.mrb[0].mxu0
      %v510 = vadd.f32 0.0, %v509
      %v511 = vpop.f32.mrb[0].mxu0
      %512 = vdwg.mxu0
      %514 = vrot.lane.b32.xlu0 %v510, 32
      %v515 = vpop.permute.xlu0 %514
      %v517 = vadd.f32 %v352, %v515
      %vm518 = vcmask 519424
      %519 = vst.msk [vmem:[%s290] sm:$0xf] %vm518, %v517
      %v520 = vld [vmem:[%s271] sm:$0xf]
      %522 = vrot.lane.b32.xlu0 %v520, 112
      %v523 = vpop.permute.xlu0 %522
      %v524 = vsel %vm360, %v523, 0
      %526 = vmatprep.subr.mxu0 0.0
      %527 = vmatpush1.msra.mxu0 %v358
      %528 = vmatprep.subr.mxu0 0.0
      %529 = vmatpush1.msra.mxu0 0.0
      %530 = vmatprep.subr.mxu0 0.0
      %531 = vmatpush1.msra.mxu0 0.0
      %532 = vmatprep.subr.mxu0 0.0
      %533 = vmatpush1.msra.mxu0 0.0
      %534 = vmatprep.subr.mxu0 0.0
      %535 = vmatpush1.msra.mxu0 0.0
      %536 = vmatprep.subr.mxu0 0.0
      %537 = vmatpush1.msra.mxu0 0.0
      %538 = vmatprep.subr.mxu0 0.0
      %539 = vmatpush1.msra.mxu0 0.0
      %540 = vmatprep.subr.mxu0 0.0
      %541 = vmatpush1.msra.mxu0 0.0
      %542 = vmatprep.subr.mxu0 0.0
      %543 = vmatpush1.msra.mxu0 0.0
      %544 = vmatprep.subr.mxu0 0.0
      %545 = vmatpush1.msra.mxu0 0.0
      %546 = vmatprep.subr.mxu0 0.0
      %547 = vmatpush1.msra.mxu0 0.0
      %548 = vmatprep.subr.mxu0 0.0
      %549 = vmatpush1.msra.mxu0 0.0
      %550 = vmatprep.subr.mxu0 0.0
      %551 = vmatpush1.msra.mxu0 0.0
      %552 = vmatprep.subr.mxu0 0.0
      %553 = vmatpush1.msra.mxu0 0.0
      %554 = vmatprep.subr.mxu0 0.0
      %555 = vmatpush1.msra.mxu0 0.0
      %556 = vmatprep.subr.mxu0 0.0
      %557 = vmatpush1.msra.mxu0 0.0
      %558 = vmatprep.subr.mxu0 0.0
      %559 = vmatpush1.msra.mxu0 0.0
      %560 = vmatprep.subr.mxu0 0.0
      %561 = vmatpush1.msra.mxu0 0.0
      %562 = vmatprep.subr.mxu0 0.0
      %563 = vmatpush1.msra.mxu0 0.0
      %564 = vmatprep.subr.mxu0 0.0
      %565 = vmatpush1.msra.mxu0 0.0
      %566 = vmatprep.subr.mxu0 0.0
      %567 = vmatpush1.msra.mxu0 0.0
      %568 = vmatprep.subr.mxu0 0.0
      %569 = vmatpush1.msra.mxu0 0.0
      %570 = vmatprep.subr.mxu0 0.0
      %571 = vmatpush1.msra.mxu0 0.0
      %572 = vmatprep.subr.mxu0 0.0
      %573 = vmatpush1.msra.mxu0 0.0
      %574 = vmatprep.subr.mxu0 0.0
      %575 = vmatpush1.msra.mxu0 0.0
      %576 = vmatprep.subr.mxu0 0.0
      %577 = vmatpush1.msra.mxu0 0.0
      %578 = vmatprep.subr.mxu0 0.0
      %579 = vmatpush1.msra.mxu0 0.0
      %580 = vmatprep.subr.mxu0 0.0
      %581 = vmatpush1.msra.mxu0 0.0
      %582 = vmatprep.subr.mxu0 0.0
      %583 = vmatpush1.msra.mxu0 0.0
      %584 = vmatprep.subr.mxu0 0.0
      %585 = vmatpush1.msra.mxu0 0.0
      %586 = vmatprep.subr.mxu0 0.0
      %587 = vmatpush1.msra.mxu0 0.0
      %588 = vmatprep.subr.mxu0 0.0
      %589 = vmatpush1.msra.mxu0 0.0
      %590 = vmatprep.mubr.f32.mxu0 0.0
      %591 = vmatmul.mubr.f32.gmra.mrb[0].mxu0 %v524
      %v592 = vpop.f32.mrb[0].mxu0
      %v593 = vadd.f32 0.0, %v592
      %v594 = vpop.f32.mrb[0].mxu0
      %595 = vdwg.mxu0
      %597 = vrot.lane.b32.xlu0 %v593, 64
      %v598 = vpop.permute.xlu0 %597
      %v600 = vadd.f32 %v352, %v598
      %vm601 = vcmask 781824
      %602 = vst.msk [vmem:[%s290] sm:$0xf] %vm601, %v600
      %v603 = vld [vmem:[%s271] sm:$0xf]
      %605 = vrot.lane.b32.xlu0 %v603, 104
      %v606 = vpop.permute.xlu0 %605
      %v607 = vsel %vm360, %v606, 0
      %609 = vmatprep.subr.mxu0 0.0
      %610 = vmatpush1.msra.mxu0 %v358
      %611 = vmatprep.subr.mxu0 0.0
      %612 = vmatpush1.msra.mxu0 0.0
      %613 = vmatprep.subr.mxu0 0.0
      %614 = vmatpush1.msra.mxu0 0.0
      %615 = vmatprep.subr.mxu0 0.0
      %616 = vmatpush1.msra.mxu0 0.0
      %617 = vmatprep.subr.mxu0 0.0
      %618 = vmatpush1.msra.mxu0 0.0
      %619 = vmatprep.subr.mxu0 0.0
      %620 = vmatpush1.msra.mxu0 0.0
      %621 = vmatprep.subr.mxu0 0.0
      %622 = vmatpush1.msra.mxu0 0.0
      %623 = vmatprep.subr.mxu0 0.0
      %624 = vmatpush1.msra.mxu0 0.0
      %625 = vmatprep.subr.mxu0 0.0
      %626 = vmatpush1.msra.mxu0 0.0
      %627 = vmatprep.subr.mxu0 0.0
      %628 = vmatpush1.msra.mxu0 0.0
      %629 = vmatprep.subr.mxu0 0.0
      %630 = vmatpush1.msra.mxu0 0.0
      %631 = vmatprep.subr.mxu0 0.0
      %632 = vmatpush1.msra.mxu0 0.0
      %633 = vmatprep.subr.mxu0 0.0
      %634 = vmatpush1.msra.mxu0 0.0
      %635 = vmatprep.subr.mxu0 0.0
      %636 = vmatpush1.msra.mxu0 0.0
      %637 = vmatprep.subr.mxu0 0.0
      %638 = vmatpush1.msra.mxu0 0.0
      %639 = vmatprep.subr.mxu0 0.0
      %640 = vmatpush1.msra.mxu0 0.0
      %641 = vmatprep.subr.mxu0 0.0
      %642 = vmatpush1.msra.mxu0 0.0
      %643 = vmatprep.subr.mxu0 0.0
      %644 = vmatpush1.msra.mxu0 0.0
      %645 = vmatprep.subr.mxu0 0.0
      %646 = vmatpush1.msra.mxu0 0.0
      %647 = vmatprep.subr.mxu0 0.0
      %648 = vmatpush1.msra.mxu0 0.0
      %649 = vmatprep.subr.mxu0 0.0
      %650 = vmatpush1.msra.mxu0 0.0
      %651 = vmatprep.subr.mxu0 0.0
      %652 = vmatpush1.msra.mxu0 0.0
      %653 = vmatprep.subr.mxu0 0.0
      %654 = vmatpush1.msra.mxu0 0.0
      %655 = vmatprep.subr.mxu0 0.0
      %656 = vmatpush1.msra.mxu0 0.0
      %657 = vmatprep.subr.mxu0 0.0
      %658 = vmatpush1.msra.mxu0 0.0
      %659 = vmatprep.subr.mxu0 0.0
      %660 = vmatpush1.msra.mxu0 0.0
      %661 = vmatprep.subr.mxu0 0.0
      %662 = vmatpush1.msra.mxu0 0.0
      %663 = vmatprep.subr.mxu0 0.0
      %664 = vmatpush1.msra.mxu0 0.0
      %665 = vmatprep.subr.mxu0 0.0
      %666 = vmatpush1.msra.mxu0 0.0
      %667 = vmatprep.subr.mxu0 0.0
      %668 = vmatpush1.msra.mxu0 0.0
      %669 = vmatprep.subr.mxu0 0.0
      %670 = vmatpush1.msra.mxu0 0.0
      %671 = vmatprep.subr.mxu0 0.0
      %672 = vmatpush1.msra.mxu0 0.0
      %673 = vmatprep.mubr.f32.mxu0 0.0
      %674 = vmatmul.mubr.f32.gmra.mrb[0].mxu0 %v607
      %v675 = vpop.f32.mrb[0].mxu0
      %v676 = vadd.f32 0.0, %v675
      %v677 = vpop.f32.mrb[0].mxu0
      %678 = vdwg.mxu0
      %680 = vrot.lane.b32.xlu0 %v676, 96
      %v681 = vpop.permute.xlu0 %680
      %v683 = vadd.f32 %v352, %v681
      %vm684 = vcmask 1044224
      %685 = vst.msk [vmem:[%s290] sm:$0xf] %vm684, %v683
      %v686 = vld [vmem:[%s271] sm:$0xf]
      %688 = vrot.lane.b32.xlu0 %v686, 96
      %v689 = vpop.permute.xlu0 %688
      %v690 = vsel %vm360, %v689, 0
      %692 = vmatprep.subr.mxu0 0.0
      %693 = vmatpush1.msra.mxu0 %v358
      %694 = vmatprep.subr.mxu0 0.0
      %695 = vmatpush1.msra.mxu0 0.0
      %696 = vmatprep.subr.mxu0 0.0
      %697 = vmatpush1.msra.mxu0 0.0
      %698 = vmatprep.subr.mxu0 0.0
      %699 = vmatpush1.msra.mxu0 0.0
      %700 = vmatprep.subr.mxu0 0.0
      %701 = vmatpush1.msra.mxu0 0.0
      %702 = vmatprep.subr.mxu0 0.0
      %703 = vmatpush1.msra.mxu0 0.0
      %704 = vmatprep.subr.mxu0 0.0
      %705 = vmatpush1.msra.mxu0 0.0
      %706 = vmatprep.subr.mxu0 0.0
      %707 = vmatpush1.msra.mxu0 0.0
      %708 = vmatprep.subr.mxu0 0.0
      %709 = vmatpush1.msra.mxu0 0.0
      %710 = vmatprep.subr.mxu0 0.0
      %711 = vmatpush1.msra.mxu0 0.0
      %712 = vmatprep.subr.mxu0 0.0
      %713 = vmatpush1.msra.mxu0 0.0
      %714 = vmatprep.subr.mxu0 0.0
      %715 = vmatpush1.msra.mxu0 0.0
      %716 = vmatprep.subr.mxu0 0.0
      %717 = vmatpush1.msra.mxu0 0.0
      %718 = vmatprep.subr.mxu0 0.0
      %719 = vmatpush1.msra.mxu0 0.0
      %720 = vmatprep.subr.mxu0 0.0
      %721 = vmatpush1.msra.mxu0 0.0
      %722 = vmatprep.subr.mxu0 0.0
      %723 = vmatpush1.msra.mxu0 0.0
      %724 = vmatprep.subr.mxu0 0.0
      %725 = vmatpush1.msra.mxu0 0.0
      %726 = vmatprep.subr.mxu0 0.0
      %727 = vmatpush1.msra.mxu0 0.0
      %728 = vmatprep.subr.mxu0 0.0
      %729 = vmatpush1.msra.mxu0 0.0
      %730 = vmatprep.subr.mxu0 0.0
      %731 = vmatpush1.msra.mxu0 0.0
      %732 = vmatprep.subr.mxu0 0.0
      %733 = vmatpush1.msra.mxu0 0.0
      %734 = vmatprep.subr.mxu0 0.0
      %735 = vmatpush1.msra.mxu0 0.0
      %736 = vmatprep.subr.mxu0 0.0
      %737 = vmatpush1.msra.mxu0 0.0
      %738 = vmatprep.subr.mxu0 0.0
      %739 = vmatpush1.msra.mxu0 0.0
      %740 = vmatprep.subr.mxu0 0.0
      %741 = vmatpush1.msra.mxu0 0.0
      %742 = vmatprep.subr.mxu0 0.0
      %743 = vmatpush1.msra.mxu0 0.0
      %744 = vmatprep.subr.mxu0 0.0
      %745 = vmatpush1.msra.mxu0 0.0
      %746 = vmatprep.subr.mxu0 0.0
      %747 = vmatpush1.msra.mxu0 0.0
      %748 = vmatprep.subr.mxu0 0.0
      %749 = vmatpush1.msra.mxu0 0.0
      %750 = vmatprep.subr.mxu0 0.0
      %751 = vmatpush1.msra.mxu0 0.0
      %752 = vmatprep.subr.mxu0 0.0
      %753 = vmatpush1.msra.mxu0 0.0
      %754 = vmatprep.subr.mxu0 0.0
      %755 = vmatpush1.msra.mxu0 0.0
      %756 = vmatprep.mubr.f32.mxu0 0.0
      %757 = vmatmul.mubr.f32.gmra.mrb[0].mxu0 %v690
      %v758 = vpop.f32.mrb[0].mxu0
      %v759 = vadd.f32 0.0, %v758
      %v760 = vpop.f32.mrb[0].mxu0
      %761 = vdwg.mxu0
      %v762 = vadd.f32 %v354, %v759
      %763 = vst.msk [vmem:[%s290 + $0x4] sm:$0xf] %vm435, %v762
      %v764 = vld [vmem:[%s271] sm:$0xf]
      %766 = vrot.lane.b32.xlu0 %v764, 88
      %v767 = vpop.permute.xlu0 %766
      %v768 = vsel %vm360, %v767, 0
      %770 = vmatprep.subr.mxu0 0.0
      %771 = vmatpush1.msra.mxu0 %v358
      %772 = vmatprep.subr.mxu0 0.0
      %773 = vmatpush1.msra.mxu0 0.0
      %774 = vmatprep.subr.mxu0 0.0
      %775 = vmatpush1.msra.mxu0 0.0
      %776 = vmatprep.subr.mxu0 0.0
      %777 = vmatpush1.msra.mxu0 0.0
      %778 = vmatprep.subr.mxu0 0.0
      %779 = vmatpush1.msra.mxu0 0.0
      %780 = vmatprep.subr.mxu0 0.0
      %781 = vmatpush1.msra.mxu0 0.0
      %782 = vmatprep.subr.mxu0 0.0
      %783 = vmatpush1.msra.mxu0 0.0
      %784 = vmatprep.subr.mxu0 0.0
      %785 = vmatpush1.msra.mxu0 0.0
      %786 = vmatprep.subr.mxu0 0.0
      %787 = vmatpush1.msra.mxu0 0.0
      %788 = vmatprep.subr.mxu0 0.0
      %789 = vmatpush1.msra.mxu0 0.0
      %790 = vmatprep.subr.mxu0 0.0
      %791 = vmatpush1.msra.mxu0 0.0
      %792 = vmatprep.subr.mxu0 0.0
      %793 = vmatpush1.msra.mxu0 0.0
      %794 = vmatprep.subr.mxu0 0.0
      %795 = vmatpush1.msra.mxu0 0.0
      %796 = vmatprep.subr.mxu0 0.0
      %797 = vmatpush1.msra.mxu0 0.0
      %798 = vmatprep.subr.mxu0 0.0
      %799 = vmatpush1.msra.mxu0 0.0
      %800 = vmatprep.subr.mxu0 0.0
      %801 = vmatpush1.msra.mxu0 0.0
      %802 = vmatprep.subr.mxu0 0.0
      %803 = vmatpush1.msra.mxu0 0.0
      %804 = vmatprep.subr.mxu0 0.0
      %805 = vmatpush1.msra.mxu0 0.0
      %806 = vmatprep.subr.mxu0 0.0
      %807 = vmatpush1.msra.mxu0 0.0
      %808 = vmatprep.subr.mxu0 0.0
      %809 = vmatpush1.msra.mxu0 0.0
      %810 = vmatprep.subr.mxu0 0.0
      %811 = vmatpush1.msra.mxu0 0.0
      %812 = vmatprep.subr.mxu0 0.0
      %813 = vmatpush1.msra.mxu0 0.0
      %814 = vmatprep.subr.mxu0 0.0
      %815 = vmatpush1.msra.mxu0 0.0
      %816 = vmatprep.subr.mxu0 0.0
      %817 = vmatpush1.msra.mxu0 0.0
      %818 = vmatprep.subr.mxu0 0.0
      %819 = vmatpush1.msra.mxu0 0.0
      %820 = vmatprep.subr.mxu0 0.0
      %821 = vmatpush1.msra.mxu0 0.0
      %822 = vmatprep.subr.mxu0 0.0
      %823 = vmatpush1.msra.mxu0 0.0
      %824 = vmatprep.subr.mxu0 0.0
      %825 = vmatpush1.msra.mxu0 0.0
      %826 = vmatprep.subr.mxu0 0.0
      %827 = vmatpush1.msra.mxu0 0.0
      %828 = vmatprep.subr.mxu0 0.0
      %829 = vmatpush1.msra.mxu0 0.0
      %830 = vmatprep.subr.mxu0 0.0
      %831 = vmatpush1.msra.mxu0 0.0
      %832 = vmatprep.subr.mxu0 0.0
      %833 = vmatpush1.msra.mxu0 0.0
      %834 = vmatprep.mubr.f32.mxu0 0.0
      %835 = vmatmul.mubr.f32.gmra.mrb[0].mxu0 %v768
      %v836 = vpop.f32.mrb[0].mxu0
      %v837 = vadd.f32 0.0, %v836
      %v838 = vpop.f32.mrb[0].mxu0
      %839 = vdwg.mxu0
      %841 = vrot.lane.b32.xlu0 %v837, 32
      %v842 = vpop.permute.xlu0 %841
      %v844 = vadd.f32 %v354, %v842
      %845 = vst.msk [vmem:[%s290 + $0x4] sm:$0xf] %vm518, %v844
      %v846 = vld [vmem:[%s271] sm:$0xf]
      %848 = vrot.lane.b32.xlu0 %v846, 80
      %v849 = vpop.permute.xlu0 %848
      %v850 = vsel %vm360, %v849, 0
      %852 = vmatprep.subr.mxu0 0.0
      %853 = vmatpush1.msra.mxu0 %v358
      %854 = vmatprep.subr.mxu0 0.0
      %855 = vmatpush1.msra.mxu0 0.0
      %856 = vmatprep.subr.mxu0 0.0
      %857 = vmatpush1.msra.mxu0 0.0
      %858 = vmatprep.subr.mxu0 0.0
      %859 = vmatpush1.msra.mxu0 0.0
      %860 = vmatprep.subr.mxu0 0.0
      %861 = vmatpush1.msra.mxu0 0.0
      %862 = vmatprep.subr.mxu0 0.0
      %863 = vmatpush1.msra.mxu0 0.0
      %864 = vmatprep.subr.mxu0 0.0
      %865 = vmatpush1.msra.mxu0 0.0
      %866 = vmatprep.subr.mxu0 0.0
      %867 = vmatpush1.msra.mxu0 0.0
      %868 = vmatprep.subr.mxu0 0.0
      %869 = vmatpush1.msra.mxu0 0.0
      %870 = vmatprep.subr.mxu0 0.0
      %871 = vmatpush1.msra.mxu0 0.0
      %872 = vmatprep.subr.mxu0 0.0
      %873 = vmatpush1.msra.mxu0 0.0
      %874 = vmatprep.subr.mxu0 0.0
      %875 = vmatpush1.msra.mxu0 0.0
      %876 = vmatprep.subr.mxu0 0.0
      %877 = vmatpush1.msra.mxu0 0.0
      %878 = vmatprep.subr.mxu0 0.0
      %879 = vmatpush1.msra.mxu0 0.0
      %880 = vmatprep.subr.mxu0 0.0
      %881 = vmatpush1.msra.mxu0 0.0
      %882 = vmatprep.subr.mxu0 0.0
      %883 = vmatpush1.msra.mxu0 0.0
      %884 = vmatprep.subr.mxu0 0.0
      %885 = vmatpush1.msra.mxu0 0.0
      %886 = vmatprep.subr.mxu0 0.0
      %887 = vmatpush1.msra.mxu0 0.0
      %888 = vmatprep.subr.mxu0 0.0
      %889 = vmatpush1.msra.mxu0 0.0
      %890 = vmatprep.subr.mxu0 0.0
      %891 = vmatpush1.msra.mxu0 0.0
      %892 = vmatprep.subr.mxu0 0.0
      %893 = vmatpush1.msra.mxu0 0.0
      %894 = vmatprep.subr.mxu0 0.0
      %895 = vmatpush1.msra.mxu0 0.0
      %896 = vmatprep.subr.mxu0 0.0
      %897 = vmatpush1.msra.mxu0 0.0
      %898 = vmatprep.subr.mxu0 0.0
      %899 = vmatpush1.msra.mxu0 0.0
      %900 = vmatprep.subr.mxu0 0.0
      %901 = vmatpush1.msra.mxu0 0.0
      %902 = vmatprep.subr.mxu0 0.0
      %903 = vmatpush1.msra.mxu0 0.0
      %904 = vmatprep.subr.mxu0 0.0
      %905 = vmatpush1.msra.mxu0 0.0
      %906 = vmatprep.subr.mxu0 0.0
      %907 = vmatpush1.msra.mxu0 0.0
      %908 = vmatprep.subr.mxu0 0.0
      %909 = vmatpush1.msra.mxu0 0.0
      %910 = vmatprep.subr.mxu0 0.0
      %911 = vmatpush1.msra.mxu0 0.0
      %912 = vmatprep.subr.mxu0 0.0
      %913 = vmatpush1.msra.mxu0 0.0
      %914 = vmatprep.subr.mxu0 0.0
      %915 = vmatpush1.msra.mxu0 0.0
      %916 = vmatprep.mubr.f32.mxu0 0.0
      %917 = vmatmul.mubr.f32.gmra.mrb[0].mxu0 %v850
      %v918 = vpop.f32.mrb[0].mxu0
      %v919 = vadd.f32 0.0, %v918
      %v920 = vpop.f32.mrb[0].mxu0
      %921 = vdwg.mxu0
      %923 = vrot.lane.b32.xlu0 %v919, 64
      %v924 = vpop.permute.xlu0 %923
      %v926 = vadd.f32 %v354, %v924
      %927 = vst.msk [vmem:[%s290 + $0x4] sm:$0xf] %vm601, %v926
      %v928 = vld [vmem:[%s271] sm:$0xf]
      %930 = vrot.lane.b32.xlu0 %v928, 72
      %v931 = vpop.permute.xlu0 %930
      %v932 = vsel %vm360, %v931, 0
      %934 = vmatprep.subr.mxu0 0.0
      %935 = vmatpush1.msra.mxu0 %v358
      %936 = vmatprep.subr.mxu0 0.0
      %937 = vmatpush1.msra.mxu0 0.0
      %938 = vmatprep.subr.mxu0 0.0
      %939 = vmatpush1.msra.mxu0 0.0
      %940 = vmatprep.subr.mxu0 0.0
      %941 = vmatpush1.msra.mxu0 0.0
      %942 = vmatprep.subr.mxu0 0.0
      %943 = vmatpush1.msra.mxu0 0.0
      %944 = vmatprep.subr.mxu0 0.0
      %945 = vmatpush1.msra.mxu0 0.0
      %946 = vmatprep.subr.mxu0 0.0
      %947 = vmatpush1.msra.mxu0 0.0
      %948 = vmatprep.subr.mxu0 0.0
      %949 = vmatpush1.msra.mxu0 0.0
      %950 = vmatprep.subr.mxu0 0.0
      %951 = vmatpush1.msra.mxu0 0.0
      %952 = vmatprep.subr.mxu0 0.0
      %953 = vmatpush1.msra.mxu0 0.0
      %954 = vmatprep.subr.mxu0 0.0
      %955 = vmatpush1.msra.mxu0 0.0
      %956 = vmatprep.subr.mxu0 0.0
      %957 = vmatpush1.msra.mxu0 0.0
      %958 = vmatprep.subr.mxu0 0.0
      %959 = vmatpush1.msra.mxu0 0.0
      %960 = vmatprep.subr.mxu0 0.0
      %961 = vmatpush1.msra.mxu0 0.0
      %962 = vmatprep.subr.mxu0 0.0
      %963 = vmatpush1.msra.mxu0 0.0
      %964 = vmatprep.subr.mxu0 0.0
      %965 = vmatpush1.msra.mxu0 0.0
      %966 = vmatprep.subr.mxu0 0.0
      %967 = vmatpush1.msra.mxu0 0.0
      %968 = vmatprep.subr.mxu0 0.0
      %969 = vmatpush1.msra.mxu0 0.0
      %970 = vmatprep.subr.mxu0 0.0
      %971 = vmatpush1.msra.mxu0 0.0
      %972 = vmatprep.subr.mxu0 0.0
      %973 = vmatpush1.msra.mxu0 0.0
      %974 = vmatprep.subr.mxu0 0.0
      %975 = vmatpush1.msra.mxu0 0.0
      %976 = vmatprep.subr.mxu0 0.0
      %977 = vmatpush1.msra.mxu0 0.0
      %978 = vmatprep.subr.mxu0 0.0
      %979 = vmatpush1.msra.mxu0 0.0
      %980 = vmatprep.subr.mxu0 0.0
      %981 = vmatpush1.msra.mxu0 0.0
      %982 = vmatprep.subr.mxu0 0.0
      %983 = vmatpush1.msra.mxu0 0.0
      %984 = vmatprep.subr.mxu0 0.0
      %985 = vmatpush1.msra.mxu0 0.0
      %986 = vmatprep.subr.mxu0 0.0
      %987 = vmatpush1.msra.mxu0 0.0
      %988 = vmatprep.subr.mxu0 0.0
      %989 = vmatpush1.msra.mxu0 0.0
      %990 = vmatprep.subr.mxu0 0.0
      %991 = vmatpush1.msra.mxu0 0.0
      %992 = vmatprep.subr.mxu0 0.0
      %993 = vmatpush1.msra.mxu0 0.0
      %994 = vmatprep.subr.mxu0 0.0
      %995 = vmatpush1.msra.mxu0 0.0
      %996 = vmatprep.subr.mxu0 0.0
      %997 = vmatpush1.msra.mxu0 0.0
      %998 = vmatprep.mubr.f32.mxu0 0.0
      %999 = vmatmul.mubr.f32.gmra.mrb[0].mxu0 %v932
      %v1000 = vpop.f32.mrb[0].mxu0
      %v1001 = vadd.f32 0.0, %v1000
      %v1002 = vpop.f32.mrb[0].mxu0
      %1003 = vdwg.mxu0
      %1005 = vrot.lane.b32.xlu0 %v1001, 96
      %v1006 = vpop.permute.xlu0 %1005
      %v1008 = vadd.f32 %v354, %v1006
      %1009 = vst.msk [vmem:[%s290 + $0x4] sm:$0xf] %vm684, %v1008
      %s1010 = smul.u32 2, %s21
      %p1011 = scmp.lt.s32.totalorder %s20, 1
      %s1012 = scalar_select %p1011, %s20, 1
      %p1013 = scmp.lt.s32.totalorder %s1010, 1
      %s1014 = scalar_select %p1013, %s1010, 1
      %s1015 = smul.addr %s1012, 2
      %s1016 = sadd.s32 %s1014, %s1015
      %s1017 = smul.addr %s1016, 4
      %s1018 = scalar_lea.vmem %s5, %s1017
      // Predicated region
      $region41: #{fpn_block_pallas.1} parent=39 // pred_check
        %p1019 = pneg %p167
      $region42: #{fpn_block_pallas.1} parent=39 // pred_check_branch
        %1021 = sbr.rel (%p1019) target = $region44
      $region43: #{fpn_block_pallas.1} parent=39 // pred_region
        %s1022 = smul.u32 2, %s21
      $region44: #{fpn_block_pallas.1} parent=39 // pred_fallthru
        _
    $region40: #{fpn_block_pallas.1} parent=5 // pred_fallthru
      _
    %p1023 = scmp.le.s32.totalorder 2, %s11
    // Predicated region
    $region45: #{fpn_block_pallas.1} parent=5 // pred_check
      %p1024 = pneg %p1023
    $region46: #{fpn_block_pallas.1} parent=5 // pred_check_branch
      %1026 = sbr.rel (%p1024) target = $region48
    $region47: #{fpn_block_pallas.1} parent=5 // pred_region
      %s1027 = ssub.s32 %s11, 2
      // Predicated region
      $region49: #{fpn_block_pallas.1} parent=47 // pred_check
        %p1028 = pneg %p173
      $region50: #{fpn_block_pallas.1} parent=47 // pred_check_branch
        %1030 = sbr.rel (%p1028) target = $region52
      $region51: #{fpn_block_pallas.1} parent=47 // pred_region
        %s1031 = smul.u32 2, %s23
        %p1032 = scmp.lt.s32.totalorder %s22, 1
        %s1033 = scalar_select %p1032, %s22, 1
        %p1034 = scmp.lt.s32.totalorder %s1031, 1
        %s1035 = scalar_select %p1034, %s1031, 1
        %s1036 = smul.addr %s1033, 2
        %s1037 = sadd.s32 %s1035, %s1036
        %s1038 = smul.addr %s1037, 4
        %s1039 = scalar_lea.vmem %s5, %s1038
      $region52: #{fpn_block_pallas.1} parent=47 // pred_fallthru
        _
    $region48: #{fpn_block_pallas.1} parent=5 // pred_fallthru
      _
  $region6: #{fpn_block_pallas.1} parent=0 // loop_footer
    %s15 = sadd.s32 1, %s11
  $region7: #{fpn_block_pallas.1} parent=0 // loop_footer_branch
    %10 = sbr.rel target = $region3
  $region8: #{fpn_block_pallas.1} parent=0 // loop_exit
    _

</llo_original>
